<compile_context>
chip_gen: v6e
topology: v6e:2x2x1
jax: 0.10.0
libtpu: 0.0.40
codegen_flags: <defaults>
</compile_context>

<pallas_src>
import functools

import jax
import jax.numpy as jnp
from jax.experimental import pallas as pl
from jax.experimental.pallas import tpu as pltpu


def make_bottleneck_kernel(H, W, pad_lanes=128):
    HW = H * W
    assert pad_lanes >= W + 1

    def kernel(x_ref, w1_ref, s1_ref, b1_ref,
               w2_ref, s2_ref, b2_ref,
               w3_ref, s3_ref, b3_ref, out_ref):
        x = x_ref[0]                                   # (Cin, HW), f32
        Cmid = w1_ref.shape[0]

        # ---- conv1 (1x1) + bn1 + relu ----  w1:(Cmid,Cin) @ x:(Cin,HW)
        y1 = jnp.dot(w1_ref[...], x.astype(jnp.bfloat16),
                     preferred_element_type=jnp.float32)        # (Cmid, HW)
        y1 = jnp.maximum(y1 * s1_ref[...] + b1_ref[...], 0.0)

        # ---- conv2 (3x3, stride 1, pad 1) + bn2 + relu ----
        # Hoisted per-lane column index + W-boundary masks (computed once).
        ww = jax.lax.broadcasted_iota(jnp.int32, (1, HW), 1) % W
        mask_l = ww >= 1            # valid when reading column w-1
        mask_r = ww <= (W - 2)      # valid when reading column w+1

        # Zero lane padding: out-of-range rows (h-1 < 0 or h+1 >= H) read zeros.
        zpad = jnp.zeros((Cmid, pad_lanes), dtype=jnp.float32)
        ypad = jnp.concatenate([zpad, y1, zpad], axis=1)  # (Cmid, HW + 2*pad)

        taps = []
        for dh in (-1, 0, 1):
            for dw in (-1, 0, 1):
                off = pad_lanes + dh * W + dw          # static lane offset
                patch = ypad[:, off:off + HW]          # (Cmid, HW)
                if dw == -1:
                    patch = jnp.where(mask_l, patch, 0.0)
                elif dw == 1:
                    patch = jnp.where(mask_r, patch, 0.0)
                taps.append(patch)
        stacked = jnp.concatenate(taps, axis=0)        # (9*Cmid, HW)

        # Single fused contraction: w2:(Cmid, 9*Cmid) @ stacked:(9*Cmid, HW)
        y2 = jnp.dot(w2_ref[...], stacked.astype(jnp.bfloat16),
                     preferred_element_type=jnp.float32)        # (Cmid, HW)
        y2 = jnp.maximum(y2 * s2_ref[...] + b2_ref[...], 0.0)

        # ---- conv3 (1x1) + bn3 + residual add + relu ----
        y3 = jnp.dot(w3_ref[...], y2.astype(jnp.bfloat16),
                     preferred_element_type=jnp.float32)        # (Cout, HW)
        y3 = y3 * s3_ref[...] + b3_ref[...]
        out_ref[0] = jnp.maximum(y3 + x, 0.0)

    return kernel


def bottleneck_forward(x_nchw, w1, s1, b1, w2f, s2, b2, w3, s3, b3):
    N, Cin, H, W = x_nchw.shape
    HW = H * W
    Cout = w3.shape[0]

    # NCHW -> (N, C, H*W): pure reshape, no transpose.
    x = x_nchw.reshape(N, Cin, HW)

    def full_spec(arr):
        nd = arr.ndim
        return pl.BlockSpec(arr.shape, lambda n, _nd=nd: (0,) * _nd)

    out = pl.pallas_call(
        make_bottleneck_kernel(H, W),
        out_shape=jax.ShapeDtypeStruct((N, Cout, HW), jnp.float32),
        grid=(N,),
        in_specs=[
            pl.BlockSpec((1, Cin, HW), lambda n: (n, 0, 0)),
            full_spec(w1), full_spec(s1), full_spec(b1),
            full_spec(w2f), full_spec(s2), full_spec(b2),
            full_spec(w3), full_spec(s3), full_spec(b3),
        ],
        out_specs=pl.BlockSpec((1, Cout, HW), lambda n: (n, 0, 0)),
        compiler_params=pltpu.CompilerParams(
            dimension_semantics=("parallel",)),
    )(x, w1, s1, b1, w2f, s2, b2, w3, s3, b3)

    # (N, Cout, H*W) -> NCHW: pure reshape.
    return out.reshape(N, Cout, H, W)


# ------------------------- pure-JAX reference -------------------------
def _bn_eval(x, gamma, beta, mean, var, eps=1e-5):
    g = gamma[None, :, None, None]
    b = beta[None, :, None, None]
    m = mean[None, :, None, None]
    v = var[None, :, None, None]
    return (x - m) / jnp.sqrt(v + eps) * g + b


def reference_forward(x, w1_t, bn1, w2_t, bn2, w3_t, bn3):
    dn = ("NCHW", "OIHW", "NCHW")
    conv = functools.partial(jax.lax.conv_general_dilated,
                             window_strides=(1, 1), dimension_numbers=dn)
    out = conv(x, w1_t, padding=[(0, 0), (0, 0)])
    out = jax.nn.relu(_bn_eval(out, *bn1))
    out = conv(out, w2_t, padding=[(1, 1), (1, 1)])
    out = jax.nn.relu(_bn_eval(out, *bn2))
    out = conv(out, w3_t, padding=[(0, 0), (0, 0)])
    out = _bn_eval(out, *bn3)
    return jax.nn.relu(out + x)


# ------------------------- parameter setup -------------------------
def fold_bn(gamma, beta, mean, var, eps=1e-5):
    scale = gamma / jnp.sqrt(var + eps)
    bias = beta - mean * scale
    # (C, 1): broadcast per-sublane over the HW lane axis.
    return scale[:, None].astype(jnp.float32), bias[:, None].astype(jnp.float32)


def make_bn_params(key, c):
    k1, k2, k3, k4 = jax.random.split(key, 4)
    gamma = 1.0 + 0.1 * jax.random.normal(k1, (c,), jnp.float32)
    beta = 0.1 * jax.random.normal(k2, (c,), jnp.float32)
    mean = 0.05 * jax.random.normal(k3, (c,), jnp.float32)
    var = 1.0 + 0.1 * jax.nn.sigmoid(jax.random.normal(k4, (c,), jnp.float32))
    return gamma, beta, mean, var


if __name__ == "__main__":
    # Bottleneck(in_filters=16, out_filters=8, expansion=2), downsample=None
    # (so out_filters * expansion == in_filters and the residual add is valid).
    N, Cin, H, W = 2, 16, 16, 16
    Cmid, expansion = 8, 2
    Cout = Cmid * expansion
    assert Cout == Cin

    key = jax.random.PRNGKey(0)
    kx, kw1, kw2, kw3, kb1, kb2, kb3 = jax.random.split(key, 7)

    x = jax.random.normal(kx, (N, Cin, H, W), jnp.float32)

    # conv weights in torch OIHW layout (deterministic synthetic init)
    w1_t = 0.1 * jax.random.normal(kw1, (Cmid, Cin, 1, 1), jnp.float32)
    w2_t = 0.1 * jax.random.normal(kw2, (Cmid, Cmid, 3, 3), jnp.float32)
    w3_t = 0.1 * jax.random.normal(kw3, (Cout, Cmid, 1, 1), jnp.float32)

    bn1 = make_bn_params(kb1, Cmid)
    bn2 = make_bn_params(kb2, Cmid)
    bn3 = make_bn_params(kb3, Cout)

    # kernel-side layouts (channel-major, bf16 MXU operands)
    w1 = w1_t[:, :, 0, 0].astype(jnp.bfloat16)                     # (Cmid, Cin)
    # (O, I, 3, 3) -> (O, kh, kw, I) -> (O, 9*I); tap index k = kh*3 + kw.
    w2f = jnp.transpose(w2_t, (0, 2, 3, 1)).reshape(
        Cmid, 9 * Cmid).astype(jnp.bfloat16)                       # (Cmid, 9*Cmid)
    w3 = w3_t[:, :, 0, 0].astype(jnp.bfloat16)                     # (Cout, Cmid)
    s1, b1 = fold_bn(*bn1)
    s2, b2 = fold_bn(*bn2)
    s3, b3 = fold_bn(*bn3)

    out = bottleneck_forward(x, w1, s1, b1, w2f, s2, b2, w3, s3, b3)
    out = jax.block_until_ready(out)

    ref = jax.block_until_ready(
        reference_forward(x, w1_t, bn1, w2_t, bn2, w3_t, bn3))

    # bf16 MXU operands (f32 accumulation) -> slightly looser tolerance.
    if not jnp.allclose(out, ref, atol=2e-2, rtol=2e-2):
        raise AssertionError(
            f"mismatch: max abs err = {float(jnp.max(jnp.abs(out - ref)))}")

    print("KERNEL_OK")
</pallas_src>

<mosaic_0001>
module attributes {stable_mosaic.version = 11 : i64} {
  func.func @kernel(%arg0: i32, %arg1: memref<1x16x256xf32, #tpu.memory_space<vmem>>, %arg2: memref<8x16xbf16, #tpu.memory_space<vmem>>, %arg3: memref<8x1xf32, #tpu.memory_space<vmem>>, %arg4: memref<8x1xf32, #tpu.memory_space<vmem>>, %arg5: memref<8x72xbf16, #tpu.memory_space<vmem>>, %arg6: memref<8x1xf32, #tpu.memory_space<vmem>>, %arg7: memref<8x1xf32, #tpu.memory_space<vmem>>, %arg8: memref<16x8xbf16, #tpu.memory_space<vmem>>, %arg9: memref<16x1xf32, #tpu.memory_space<vmem>>, %arg10: memref<16x1xf32, #tpu.memory_space<vmem>>, %arg11: memref<1x16x256xf32, #tpu.memory_space<vmem>>) attributes {dimension_semantics = [#tpu.dimension_semantics<parallel>], iteration_bounds = array<i64: 2>, scalar_prefetch = 0 : i64, scratch_operands = 0 : i64, tpu.core_type = #tpu.core_type<tc>, window_params = [{transform_indices = @transform_0, window_bounds = array<i64: 1, 16, 256>}, {pipeline_mode = #tpu.pipeline_mode<synchronous>, transform_indices = @transform_1, window_bounds = array<i64: 8, 16>}, {pipeline_mode = #tpu.pipeline_mode<synchronous>, transform_indices = @transform_2, window_bounds = array<i64: 8, 1>}, {pipeline_mode = #tpu.pipeline_mode<synchronous>, transform_indices = @transform_3, window_bounds = array<i64: 8, 1>}, {pipeline_mode = #tpu.pipeline_mode<synchronous>, transform_indices = @transform_4, window_bounds = array<i64: 8, 72>}, {pipeline_mode = #tpu.pipeline_mode<synchronous>, transform_indices = @transform_5, window_bounds = array<i64: 8, 1>}, {pipeline_mode = #tpu.pipeline_mode<synchronous>, transform_indices = @transform_6, window_bounds = array<i64: 8, 1>}, {pipeline_mode = #tpu.pipeline_mode<synchronous>, transform_indices = @transform_7, window_bounds = array<i64: 16, 8>}, {pipeline_mode = #tpu.pipeline_mode<synchronous>, transform_indices = @transform_8, window_bounds = array<i64: 16, 1>}, {pipeline_mode = #tpu.pipeline_mode<synchronous>, transform_indices = @transform_9, window_bounds = array<i64: 16, 1>}, {transform_indices = @transform_10, window_bounds = array<i64: 1, 16, 256>}]} {
    %c0 = arith.constant 0 : index
    %c0_0 = arith.constant 0 : index
    %c0_1 = arith.constant 0 : index
    %0 = vector.load %arg1[%c0, %c0_0, %c0_1] : memref<1x16x256xf32, #tpu.memory_space<vmem>>, vector<1x16x256xf32>
    %1 = vector.shape_cast %0 : vector<1x16x256xf32> to vector<16x256xf32>
    %c0_2 = arith.constant 0 : index
    %c0_3 = arith.constant 0 : index
    %2 = vector.load %arg2[%c0_2, %c0_3] : memref<8x16xbf16, #tpu.memory_space<vmem>>, vector<8x16xbf16>
    %3 = arith.truncf %1 : vector<16x256xf32> to vector<16x256xbf16>
    %cst = arith.constant dense<0.000000e+00> : vector<8x256xf32>
    %4 = tpu.matmul %2, %3, %cst {dimension_numbers = #tpu.dot_dimension_numbers<[1], [0], [0], [1], [0, 0, 1, 1], [], []>} : vector<8x16xbf16>, vector<16x256xbf16>, vector<8x256xf32> -> vector<8x256xf32>
    %c0_4 = arith.constant 0 : index
    %c0_5 = arith.constant 0 : index
    %5 = vector.load %arg3[%c0_4, %c0_5] : memref<8x1xf32, #tpu.memory_space<vmem>>, vector<8x1xf32>
    %6 = vector.broadcast %5 : vector<8x1xf32> to vector<8x256xf32>
    %7 = arith.mulf %4, %6 : vector<8x256xf32>
    %c0_6 = arith.constant 0 : index
    %c0_7 = arith.constant 0 : index
    %8 = vector.load %arg4[%c0_6, %c0_7] : memref<8x1xf32, #tpu.memory_space<vmem>>, vector<8x1xf32>
    %9 = vector.broadcast %8 : vector<8x1xf32> to vector<8x256xf32>
    %10 = arith.addf %7, %9 : vector<8x256xf32>
    %cst_8 = arith.constant 0.000000e+00 : f32
    %11 = vector.broadcast %cst_8 : f32 to vector<8x256xf32>
    %12 = arith.maximumf %10, %11 : vector<8x256xf32>
    %13 = tpu.iota {dimensions = array<i32: 1>} : vector<1x256xi32>
    %c16_i32 = arith.constant 16 : i32
    %c0_i32 = arith.constant 0 : i32
    %14 = arith.cmpi eq, %c16_i32, %c0_i32 : i32
    %c1_i32 = arith.constant 1 : i32
    %15 = arith.select %14, %c1_i32, %c16_i32 : i32
    %16 = vector.broadcast %15 : i32 to vector<1x256xi32>
    %17 = arith.remsi %13, %16 : vector<1x256xi32>
    %c0_i32_9 = arith.constant 0 : i32
    %18 = vector.broadcast %c0_i32_9 : i32 to vector<1x256xi32>
    %19 = arith.cmpi ne, %17, %18 : vector<1x256xi32>
    %c0_i32_10 = arith.constant 0 : i32
    %20 = vector.broadcast %c0_i32_10 : i32 to vector<1x256xi32>
    %21 = arith.cmpi slt, %17, %20 : vector<1x256xi32>
    %c0_i32_11 = arith.constant 0 : i32
    %22 = arith.cmpi slt, %15, %c0_i32_11 : i32
    %23 = vector.broadcast %22 : i1 to vector<1x256xi1>
    %24 = vector.broadcast %23 : vector<1x256xi1> to vector<1x256xi1>
    %25 = arith.xori %21, %24 : vector<1x256xi1>
    %26 = arith.andi %25, %19 : vector<1x256xi1>
    %27 = vector.broadcast %15 : i32 to vector<1x256xi32>
    %28 = arith.addi %17, %27 : vector<1x256xi32>
    %29 = arith.select %26, %28, %17 : vector<1x256xi1>, vector<1x256xi32>
    %c1_i32_12 = arith.constant 1 : i32
    %30 = vector.broadcast %c1_i32_12 : i32 to vector<1x256xi32>
    %31 = arith.cmpi sge, %29, %30 : vector<1x256xi32>
    %c14_i32 = arith.constant 14 : i32
    %32 = vector.broadcast %c14_i32 : i32 to vector<1x256xi32>
    %33 = arith.cmpi sle, %29, %32 : vector<1x256xi32>
    %cst_13 = arith.constant 0.000000e+00 : f32
    %34 = vector.broadcast %cst_13 : f32 to vector<8x128xf32>
    %35 = tpu.concatenate %34, %12, %34 in 1 : vector<8x128xf32>, vector<8x256xf32>, vector<8x128xf32> -> vector<8x512xf32>
    %36 = vector.extract_strided_slice %35 {offsets = [0, 111], sizes = [8, 256], strides = [1, 1]} : vector<8x512xf32> to vector<8x256xf32>
    %cst_14 = arith.constant 0.000000e+00 : f32
    %37 = vector.shape_cast %31 : vector<1x256xi1> to vector<1x256xi1>
    %38 = vector.broadcast %37 : vector<1x256xi1> to vector<8x256xi1>
    %39 = vector.broadcast %cst_14 : f32 to vector<8x256xf32>
    %40 = arith.select %38, %36, %39 : vector<8x256xi1>, vector<8x256xf32>
    %41 = vector.extract_strided_slice %35 {offsets = [0, 112], sizes = [8, 256], strides = [1, 1]} : vector<8x512xf32> to vector<8x256xf32>
    %42 = vector.extract_strided_slice %35 {offsets = [0, 113], sizes = [8, 256], strides = [1, 1]} : vector<8x512xf32> to vector<8x256xf32>
    %cst_15 = arith.constant 0.000000e+00 : f32
    %43 = vector.shape_cast %33 : vector<1x256xi1> to vector<1x256xi1>
    %44 = vector.broadcast %43 : vector<1x256xi1> to vector<8x256xi1>
    %45 = vector.broadcast %cst_15 : f32 to vector<8x256xf32>
    %46 = arith.select %44, %42, %45 : vector<8x256xi1>, vector<8x256xf32>
    %47 = vector.extract_strided_slice %35 {offsets = [0, 127], sizes = [8, 256], strides = [1, 1]} : vector<8x512xf32> to vector<8x256xf32>
    %cst_16 = arith.constant 0.000000e+00 : f32
    %48 = vector.shape_cast %31 : vector<1x256xi1> to vector<1x256xi1>
    %49 = vector.broadcast %48 : vector<1x256xi1> to vector<8x256xi1>
    %50 = vector.broadcast %cst_16 : f32 to vector<8x256xf32>
    %51 = arith.select %49, %47, %50 : vector<8x256xi1>, vector<8x256xf32>
    %52 = vector.extract_strided_slice %35 {offsets = [0, 128], sizes = [8, 256], strides = [1, 1]} : vector<8x512xf32> to vector<8x256xf32>
    %53 = vector.extract_strided_slice %35 {offsets = [0, 129], sizes = [8, 256], strides = [1, 1]} : vector<8x512xf32> to vector<8x256xf32>
    %cst_17 = arith.constant 0.000000e+00 : f32
    %54 = vector.shape_cast %33 : vector<1x256xi1> to vector<1x256xi1>
    %55 = vector.broadcast %54 : vector<1x256xi1> to vector<8x256xi1>
    %56 = vector.broadcast %cst_17 : f32 to vector<8x256xf32>
    %57 = arith.select %55, %53, %56 : vector<8x256xi1>, vector<8x256xf32>
    %58 = vector.extract_strided_slice %35 {offsets = [0, 143], sizes = [8, 256], strides = [1, 1]} : vector<8x512xf32> to vector<8x256xf32>
    %cst_18 = arith.constant 0.000000e+00 : f32
    %59 = vector.shape_cast %31 : vector<1x256xi1> to vector<1x256xi1>
    %60 = vector.broadcast %59 : vector<1x256xi1> to vector<8x256xi1>
    %61 = vector.broadcast %cst_18 : f32 to vector<8x256xf32>
    %62 = arith.select %60, %58, %61 : vector<8x256xi1>, vector<8x256xf32>
    %63 = vector.extract_strided_slice %35 {offsets = [0, 144], sizes = [8, 256], strides = [1, 1]} : vector<8x512xf32> to vector<8x256xf32>
    %64 = vector.extract_strided_slice %35 {offsets = [0, 145], sizes = [8, 256], strides = [1, 1]} : vector<8x512xf32> to vector<8x256xf32>
    %cst_19 = arith.constant 0.000000e+00 : f32
    %65 = vector.shape_cast %33 : vector<1x256xi1> to vector<1x256xi1>
    %66 = vector.broadcast %65 : vector<1x256xi1> to vector<8x256xi1>
    %67 = vector.broadcast %cst_19 : f32 to vector<8x256xf32>
    %68 = arith.select %66, %64, %67 : vector<8x256xi1>, vector<8x256xf32>
    %69 = tpu.concatenate %40, %41, %46, %51, %52, %57, %62, %63, %68 in 0 : vector<8x256xf32>, vector<8x256xf32>, vector<8x256xf32>, vector<8x256xf32>, vector<8x256xf32>, vector<8x256xf32>, vector<8x256xf32>, vector<8x256xf32>, vector<8x256xf32> -> vector<72x256xf32>
    %c0_20 = arith.constant 0 : index
    %c0_21 = arith.constant 0 : index
    %70 = vector.load %arg5[%c0_20, %c0_21] : memref<8x72xbf16, #tpu.memory_space<vmem>>, vector<8x72xbf16>
    %71 = arith.truncf %69 : vector<72x256xf32> to vector<72x256xbf16>
    %cst_22 = arith.constant dense<0.000000e+00> : vector<8x256xf32>
    %72 = tpu.matmul %70, %71, %cst_22 {dimension_numbers = #tpu.dot_dimension_numbers<[1], [0], [0], [1], [0, 0, 1, 1], [], []>} : vector<8x72xbf16>, vector<72x256xbf16>, vector<8x256xf32> -> vector<8x256xf32>
    %c0_23 = arith.constant 0 : index
    %c0_24 = arith.constant 0 : index
    %73 = vector.load %arg6[%c0_23, %c0_24] : memref<8x1xf32, #tpu.memory_space<vmem>>, vector<8x1xf32>
    %74 = vector.broadcast %73 : vector<8x1xf32> to vector<8x256xf32>
    %75 = arith.mulf %72, %74 : vector<8x256xf32>
    %c0_25 = arith.constant 0 : index
    %c0_26 = arith.constant 0 : index
    %76 = vector.load %arg7[%c0_25, %c0_26] : memref<8x1xf32, #tpu.memory_space<vmem>>, vector<8x1xf32>
    %77 = vector.broadcast %76 : vector<8x1xf32> to vector<8x256xf32>
    %78 = arith.addf %75, %77 : vector<8x256xf32>
    %cst_27 = arith.constant 0.000000e+00 : f32
    %79 = vector.broadcast %cst_27 : f32 to vector<8x256xf32>
    %80 = arith.maximumf %78, %79 : vector<8x256xf32>
    %c0_28 = arith.constant 0 : index
    %c0_29 = arith.constant 0 : index
    %81 = vector.load %arg8[%c0_28, %c0_29] : memref<16x8xbf16, #tpu.memory_space<vmem>>, vector<16x8xbf16>
    %82 = arith.truncf %80 : vector<8x256xf32> to vector<8x256xbf16>
    %cst_30 = arith.constant dense<0.000000e+00> : vector<16x256xf32>
    %83 = tpu.matmul %81, %82, %cst_30 {dimension_numbers = #tpu.dot_dimension_numbers<[1], [0], [0], [1], [0, 0, 1, 1], [], []>} : vector<16x8xbf16>, vector<8x256xbf16>, vector<16x256xf32> -> vector<16x256xf32>
    %c0_31 = arith.constant 0 : index
    %c0_32 = arith.constant 0 : index
    %84 = vector.load %arg9[%c0_31, %c0_32] : memref<16x1xf32, #tpu.memory_space<vmem>>, vector<16x1xf32>
    %85 = vector.broadcast %84 : vector<16x1xf32> to vector<16x256xf32>
    %86 = arith.mulf %83, %85 : vector<16x256xf32>
    %c0_33 = arith.constant 0 : index
    %c0_34 = arith.constant 0 : index
    %87 = vector.load %arg10[%c0_33, %c0_34] : memref<16x1xf32, #tpu.memory_space<vmem>>, vector<16x1xf32>
    %88 = vector.broadcast %87 : vector<16x1xf32> to vector<16x256xf32>
    %89 = arith.addf %86, %88 : vector<16x256xf32>
    %90 = arith.addf %89, %1 : vector<16x256xf32>
    %cst_35 = arith.constant 0.000000e+00 : f32
    %91 = vector.broadcast %cst_35 : f32 to vector<16x256xf32>
    %92 = arith.maximumf %90, %91 : vector<16x256xf32>
    %c0_36 = arith.constant 0 : index
    %c0_37 = arith.constant 0 : index
    %c0_38 = arith.constant 0 : index
    %93 = vector.load %arg11[%c0_36, %c0_37, %c0_38] : memref<1x16x256xf32, #tpu.memory_space<vmem>>, vector<1x16x256xf32>
    %94 = vector.shape_cast %93 : vector<1x16x256xf32> to vector<16x256xf32>
    %95 = vector.shape_cast %92 : vector<16x256xf32> to vector<1x16x256xf32>
    tpu.vector_store %arg11[%c0_36, %c0_37, %c0_38], %95 {strides = array<i32>} : memref<1x16x256xf32, #tpu.memory_space<vmem>>, vector<1x16x256xf32>,
    return
  }
  func.func @transform_0(%arg0: i32) -> (i32, i32, i32) {
    %c0_i32 = arith.constant 0 : i32
    %c0_i32_0 = arith.constant 0 : i32
    %c0_i32_1 = arith.constant 0 : i32
    return %arg0, %c0_i32, %c0_i32_0 : i32, i32, i32
  }
  func.func @transform_1(%arg0: i32) -> (i32, i32) {
    %c0_i32 = arith.constant 0 : i32
    %c0_i32_0 = arith.constant 0 : i32
    %c0_i32_1 = arith.constant 0 : i32
    return %c0_i32, %c0_i32_0 : i32, i32
  }
  func.func @transform_2(%arg0: i32) -> (i32, i32) {
    %c0_i32 = arith.constant 0 : i32
    %c0_i32_0 = arith.constant 0 : i32
    %c0_i32_1 = arith.constant 0 : i32
    return %c0_i32, %c0_i32_0 : i32, i32
  }
  func.func @transform_3(%arg0: i32) -> (i32, i32) {
    %c0_i32 = arith.constant 0 : i32
    %c0_i32_0 = arith.constant 0 : i32
    %c0_i32_1 = arith.constant 0 : i32
    return %c0_i32, %c0_i32_0 : i32, i32
  }
  func.func @transform_4(%arg0: i32) -> (i32, i32) {
    %c0_i32 = arith.constant 0 : i32
    %c0_i32_0 = arith.constant 0 : i32
    %c0_i32_1 = arith.constant 0 : i32
    return %c0_i32, %c0_i32_0 : i32, i32
  }
  func.func @transform_5(%arg0: i32) -> (i32, i32) {
    %c0_i32 = arith.constant 0 : i32
    %c0_i32_0 = arith.constant 0 : i32
    %c0_i32_1 = arith.constant 0 : i32
    return %c0_i32, %c0_i32_0 : i32, i32
  }
  func.func @transform_6(%arg0: i32) -> (i32, i32) {
    %c0_i32 = arith.constant 0 : i32
    %c0_i32_0 = arith.constant 0 : i32
    %c0_i32_1 = arith.constant 0 : i32
    return %c0_i32, %c0_i32_0 : i32, i32
  }
  func.func @transform_7(%arg0: i32) -> (i32, i32) {
    %c0_i32 = arith.constant 0 : i32
    %c0_i32_0 = arith.constant 0 : i32
    %c0_i32_1 = arith.constant 0 : i32
    return %c0_i32, %c0_i32_0 : i32, i32
  }
  func.func @transform_8(%arg0: i32) -> (i32, i32) {
    %c0_i32 = arith.constant 0 : i32
    %c0_i32_0 = arith.constant 0 : i32
    %c0_i32_1 = arith.constant 0 : i32
    return %c0_i32, %c0_i32_0 : i32, i32
  }
  func.func @transform_9(%arg0: i32) -> (i32, i32) {
    %c0_i32 = arith.constant 0 : i32
    %c0_i32_0 = arith.constant 0 : i32
    %c0_i32_1 = arith.constant 0 : i32
    return %c0_i32, %c0_i32_0 : i32, i32
  }
  func.func @transform_10(%arg0: i32) -> (i32, i32, i32) {
    %c0_i32 = arith.constant 0 : i32
    %c0_i32_0 = arith.constant 0 : i32
    %c0_i32_1 = arith.constant 0 : i32
    return %arg0, %c0_i32, %c0_i32_0 : i32, i32, i32
  }
}

</mosaic_0001>

<llo_original>
// kernel: tpu_custom_call.1
$region0: #{tpu_custom_call.1}
  #allocation0 [shape = 'u32[]', space=smem, size = 0x4, offset = 0x4, fixed_abs, tag = 'smem constant byte address 0x4 - core index']
  #allocation1 [shape = 'u32[144,128]{1,0:T(1,128)}', space=vmem, size = 0x12000, scoped, tag = 'internal scratch']
  %s0 = inlined_call_operand.vmem [shape: f32[2,16,256], index: 0, kind: input, shape index: {}]
  %s1 = inlined_call_operand.vmem [shape: bf16[8,16], index: 1, kind: input, shape index: {}]
  %s2 = inlined_call_operand.vmem [shape: f32[8,1], index: 2, kind: input, shape index: {}]
  %s3 = inlined_call_operand.vmem [shape: f32[8,1], index: 3, kind: input, shape index: {}]
  %s4 = inlined_call_operand.vmem [shape: bf16[8,72], index: 4, kind: input, shape index: {}]
  %s5 = inlined_call_operand.vmem [shape: f32[8,1], index: 5, kind: input, shape index: {}]
  %s6 = inlined_call_operand.vmem [shape: f32[8,1], index: 6, kind: input, shape index: {}]
  %s7 = inlined_call_operand.vmem [shape: bf16[16,8], index: 7, kind: input, shape index: {}]
  %s8 = inlined_call_operand.vmem [shape: f32[16,1], index: 8, kind: input, shape index: {}]
  %s9 = inlined_call_operand.vmem [shape: f32[16,1], index: 9, kind: input, shape index: {}]
  %s10 = inlined_call_operand.hbm [shape: f32[2,16,256], index: 10, kind: output, shape index: {}]
  %s11 = sld [smem:[#allocation0]]
  $region73: #{tpu_custom_call.1} parent=0
    _
  %s13 = ssub.s32 1, %s11
  %s14 = scalar_select 0, %s13, %s11
  $region1: #{tpu_custom_call.1} parent=0
    #allocation2 [shape = 'u8[32768]{0}', space=vmem, size = 0x8000, scoped, tag = 'output window, operand 0']
    #allocation3 [shape = 's32[2]{0}', space=sflag, size = 0x8, scoped, tag = 'scoped memory for tpu_custom_call.1']
    %15 = vsyncpa [#allocation3], 0
    %s16 = scalar_lea.sflag [#allocation3], 1
    %17 = vsyncpa %s16, 0
    loop: start=0, step=1, limit=4
    $region2: #{tpu_custom_call.1} parent=1 // loop_pre_header
      _
    $region3: #{tpu_custom_call.1} parent=1 // loop_header
      %s19 = sphi 0, %s23
      %p20 = scmp.ge.s32.totalorder %s19, 4
      %s29 = sphi 0, %s31
      %s32 = sphi 0, %s29
      %s33 = sphi 0, %s32
      %s49 = sphi 0, %s33
      %s53 = sphi 0, %s53
      %s55 = sphi 0, %s53
      %s56 = sphi 0, %s55
      %s70 = sphi 0, %s56
      %s74 = sphi 0, %s74
      %s76 = sphi 0, %s74
      %s77 = sphi 0, %s76
      %s91 = sphi 0, %s77
      %s95 = sphi 0, %s95
      %s97 = sphi 0, %s95
      %s98 = sphi 0, %s97
      %s112 = sphi 0, %s98
      %s116 = sphi 0, %s116
      %s118 = sphi 0, %s116
      %s119 = sphi 0, %s118
      %s133 = sphi 0, %s119
      %s137 = sphi 0, %s137
      %s139 = sphi 0, %s137
      %s140 = sphi 0, %s139
      %s154 = sphi 0, %s140
      %s158 = sphi 0, %s158
      %s160 = sphi 0, %s158
      %s161 = sphi 0, %s160
      %s175 = sphi 0, %s161
      %s179 = sphi 0, %s179
      %s181 = sphi 0, %s179
      %s182 = sphi 0, %s181
      %s196 = sphi 0, %s182
      %s200 = sphi 0, %s200
      %s202 = sphi 0, %s200
      %s203 = sphi 0, %s202
      %s217 = sphi 0, %s203
      %s221 = sphi 0, %s221
      %s223 = sphi 0, %s221
      %s224 = sphi 0, %s223
      %s238 = sphi 0, %s224
      %s244 = sphi 0, %s246
      %s247 = sphi 0, %s244
      %s248 = sphi 0, %s247
      %s264 = sphi 0, %s248
    $region4: #{tpu_custom_call.1} parent=1 // loop_header_branch
      %22 = sbr.rel (%p20) target = $region8
    $region5: #{tpu_custom_call.1} parent=1 // loop_body
      %s24 = ssub.s32 %s19, 1
      %s25 = ssub.s32 %s19, 2
      %s26 = sadd.s32 %s19, 1
      %s27 = ssub.s32 %s19, %s26
      %p28 = scmp.eq.s32.totalorder %s27, 0
      %s30 = sadd.s32 %s29, 1
      %s31 = scalar_select %p28, %s29, %s30
      %p34 = pneg %p28
      %p35 = scmp.eq.s32.totalorder %s19, 1
      %p36 = por %p34, %p35
      %p37 = scmp.ne.s32.totalorder %s29, %s32
      %p38 = scmp.eq.s32.totalorder %s19, 0
      %p39 = por %p37, %p38
      %p40 = scmp.ne.s32.totalorder %s29, %s32
      %p41 = scmp.eq.s32.totalorder %s24, 1
      %p42 = por %p40, %p41
      %p43 = scmp.ne.s32.totalorder %s32, %s33
      %p44 = scmp.eq.s32.totalorder %s24, 0
      %p45 = por %p43, %p44
      %p46 = scmp.ne.s32.totalorder %s32, %s33
      %p47 = scmp.eq.s32.totalorder %s25, 1
      %p48 = por %p46, %p47
      %p50 = scmp.ne.s32.totalorder %s33, %s49
      %p51 = scmp.eq.s32.totalorder %s25, 0
      %p52 = por %p50, %p51
      %s54 = sadd.s32 %s53, 1
      %p57 = scmp.eq.s32.totalorder %s19, 1
      %p58 = scmp.ne.s32.totalorder %s53, %s55
      %p59 = scmp.eq.s32.totalorder %s19, 0
      %p60 = por %p58, %p59
      %p61 = scmp.ne.s32.totalorder %s53, %s55
      %p62 = scmp.eq.s32.totalorder %s24, 1
      %p63 = por %p61, %p62
      %p64 = scmp.ne.s32.totalorder %s55, %s56
      %p65 = scmp.eq.s32.totalorder %s24, 0
      %p66 = por %p64, %p65
      %p67 = scmp.ne.s32.totalorder %s55, %s56
      %p68 = scmp.eq.s32.totalorder %s25, 1
      %p69 = por %p67, %p68
      %p71 = scmp.ne.s32.totalorder %s56, %s70
      %p72 = scmp.eq.s32.totalorder %s25, 0
      %p73 = por %p71, %p72
      %s75 = sadd.s32 %s74, 1
      %p78 = scmp.eq.s32.totalorder %s19, 1
      %p79 = scmp.ne.s32.totalorder %s74, %s76
      %p80 = scmp.eq.s32.totalorder %s19, 0
      %p81 = por %p79, %p80
      %p82 = scmp.ne.s32.totalorder %s74, %s76
      %p83 = scmp.eq.s32.totalorder %s24, 1
      %p84 = por %p82, %p83
      %p85 = scmp.ne.s32.totalorder %s76, %s77
      %p86 = scmp.eq.s32.totalorder %s24, 0
      %p87 = por %p85, %p86
      %p88 = scmp.ne.s32.totalorder %s76, %s77
      %p89 = scmp.eq.s32.totalorder %s25, 1
      %p90 = por %p88, %p89
      %p92 = scmp.ne.s32.totalorder %s77, %s91
      %p93 = scmp.eq.s32.totalorder %s25, 0
      %p94 = por %p92, %p93
      %s96 = sadd.s32 %s95, 1
      %p99 = scmp.eq.s32.totalorder %s19, 1
      %p100 = scmp.ne.s32.totalorder %s95, %s97
      %p101 = scmp.eq.s32.totalorder %s19, 0
      %p102 = por %p100, %p101
      %p103 = scmp.ne.s32.totalorder %s95, %s97
      %p104 = scmp.eq.s32.totalorder %s24, 1
      %p105 = por %p103, %p104
      %p106 = scmp.ne.s32.totalorder %s97, %s98
      %p107 = scmp.eq.s32.totalorder %s24, 0
      %p108 = por %p106, %p107
      %p109 = scmp.ne.s32.totalorder %s97, %s98
      %p110 = scmp.eq.s32.totalorder %s25, 1
      %p111 = por %p109, %p110
      %p113 = scmp.ne.s32.totalorder %s98, %s112
      %p114 = scmp.eq.s32.totalorder %s25, 0
      %p115 = por %p113, %p114
      %s117 = sadd.s32 %s116, 1
      %p120 = scmp.eq.s32.totalorder %s19, 1
      %p121 = scmp.ne.s32.totalorder %s116, %s118
      %p122 = scmp.eq.s32.totalorder %s19, 0
      %p123 = por %p121, %p122
      %p124 = scmp.ne.s32.totalorder %s116, %s118
      %p125 = scmp.eq.s32.totalorder %s24, 1
      %p126 = por %p124, %p125
      %p127 = scmp.ne.s32.totalorder %s118, %s119
      %p128 = scmp.eq.s32.totalorder %s24, 0
      %p129 = por %p127, %p128
      %p130 = scmp.ne.s32.totalorder %s118, %s119
      %p131 = scmp.eq.s32.totalorder %s25, 1
      %p132 = por %p130, %p131
      %p134 = scmp.ne.s32.totalorder %s119, %s133
      %p135 = scmp.eq.s32.totalorder %s25, 0
      %p136 = por %p134, %p135
      %s138 = sadd.s32 %s137, 1
      %p141 = scmp.eq.s32.totalorder %s19, 1
      %p142 = scmp.ne.s32.totalorder %s137, %s139
      %p143 = scmp.eq.s32.totalorder %s19, 0
      %p144 = por %p142, %p143
      %p145 = scmp.ne.s32.totalorder %s137, %s139
      %p146 = scmp.eq.s32.totalorder %s24, 1
      %p147 = por %p145, %p146
      %p148 = scmp.ne.s32.totalorder %s139, %s140
      %p149 = scmp.eq.s32.totalorder %s24, 0
      %p150 = por %p148, %p149
      %p151 = scmp.ne.s32.totalorder %s139, %s140
      %p152 = scmp.eq.s32.totalorder %s25, 1
      %p153 = por %p151, %p152
      %p155 = scmp.ne.s32.totalorder %s140, %s154
      %p156 = scmp.eq.s32.totalorder %s25, 0
      %p157 = por %p155, %p156
      %s159 = sadd.s32 %s158, 1
      %p162 = scmp.eq.s32.totalorder %s19, 1
      %p163 = scmp.ne.s32.totalorder %s158, %s160
      %p164 = scmp.eq.s32.totalorder %s19, 0
      %p165 = por %p163, %p164
      %p166 = scmp.ne.s32.totalorder %s158, %s160
      %p167 = scmp.eq.s32.totalorder %s24, 1
      %p168 = por %p166, %p167
      %p169 = scmp.ne.s32.totalorder %s160, %s161
      %p170 = scmp.eq.s32.totalorder %s24, 0
      %p171 = por %p169, %p170
      %p172 = scmp.ne.s32.totalorder %s160, %s161
      %p173 = scmp.eq.s32.totalorder %s25, 1
      %p174 = por %p172, %p173
      %p176 = scmp.ne.s32.totalorder %s161, %s175
      %p177 = scmp.eq.s32.totalorder %s25, 0
      %p178 = por %p176, %p177
      %s180 = sadd.s32 %s179, 1
      %p183 = scmp.eq.s32.totalorder %s19, 1
      %p184 = scmp.ne.s32.totalorder %s179, %s181
      %p185 = scmp.eq.s32.totalorder %s19, 0
      %p186 = por %p184, %p185
      %p187 = scmp.ne.s32.totalorder %s179, %s181
      %p188 = scmp.eq.s32.totalorder %s24, 1
      %p189 = por %p187, %p188
      %p190 = scmp.ne.s32.totalorder %s181, %s182
      %p191 = scmp.eq.s32.totalorder %s24, 0
      %p192 = por %p190, %p191
      %p193 = scmp.ne.s32.totalorder %s181, %s182
      %p194 = scmp.eq.s32.totalorder %s25, 1
      %p195 = por %p193, %p194
      %p197 = scmp.ne.s32.totalorder %s182, %s196
      %p198 = scmp.eq.s32.totalorder %s25, 0
      %p199 = por %p197, %p198
      %s201 = sadd.s32 %s200, 1
      %p204 = scmp.eq.s32.totalorder %s19, 1
      %p205 = scmp.ne.s32.totalorder %s200, %s202
      %p206 = scmp.eq.s32.totalorder %s19, 0
      %p207 = por %p205, %p206
      %p208 = scmp.ne.s32.totalorder %s200, %s202
      %p209 = scmp.eq.s32.totalorder %s24, 1
      %p210 = por %p208, %p209
      %p211 = scmp.ne.s32.totalorder %s202, %s203
      %p212 = scmp.eq.s32.totalorder %s24, 0
      %p213 = por %p211, %p212
      %p214 = scmp.ne.s32.totalorder %s202, %s203
      %p215 = scmp.eq.s32.totalorder %s25, 1
      %p216 = por %p214, %p215
      %p218 = scmp.ne.s32.totalorder %s203, %s217
      %p219 = scmp.eq.s32.totalorder %s25, 0
      %p220 = por %p218, %p219
      %s222 = sadd.s32 %s221, 1
      %p225 = scmp.eq.s32.totalorder %s19, 1
      %p226 = scmp.ne.s32.totalorder %s221, %s223
      %p227 = scmp.eq.s32.totalorder %s19, 0
      %p228 = por %p226, %p227
      %p229 = scmp.ne.s32.totalorder %s221, %s223
      %p230 = scmp.eq.s32.totalorder %s24, 1
      %p231 = por %p229, %p230
      %p232 = scmp.ne.s32.totalorder %s223, %s224
      %p233 = scmp.eq.s32.totalorder %s24, 0
      %p234 = por %p232, %p233
      %p235 = scmp.ne.s32.totalorder %s223, %s224
      %p236 = scmp.eq.s32.totalorder %s25, 1
      %p237 = por %p235, %p236
      %p239 = scmp.ne.s32.totalorder %s224, %s238
      %p240 = scmp.eq.s32.totalorder %s25, 0
      %p241 = por %p239, %p240
      %s242 = ssub.s32 %s19, %s26
      %p243 = scmp.eq.s32.totalorder %s242, 0
      %s245 = sadd.s32 %s244, 1
      %s246 = scalar_select %p243, %s244, %s245
      %p249 = pneg %p243
      %p250 = scmp.eq.s32.totalorder %s19, 1
      %p251 = por %p249, %p250
      %p252 = scmp.ne.s32.totalorder %s244, %s247
      %p253 = scmp.eq.s32.totalorder %s19, 0
      %p254 = por %p252, %p253
      %p255 = scmp.ne.s32.totalorder %s244, %s247
      %p256 = scmp.eq.s32.totalorder %s24, 1
      %p257 = por %p255, %p256
      %p258 = scmp.ne.s32.totalorder %s247, %s248
      %p259 = scmp.eq.s32.totalorder %s24, 0
      %p260 = por %p258, %p259
      %p261 = scmp.ne.s32.totalorder %s247, %s248
      %p262 = scmp.eq.s32.totalorder %s25, 1
      %p263 = por %p261, %p262
      %p265 = scmp.ne.s32.totalorder %s248, %s264
      %p266 = scmp.eq.s32.totalorder %s25, 0
      %p267 = por %p265, %p266
      %p268 = scmp.le.s32.totalorder 1, %s19
      %p269 = scmp.lt.s32.totalorder %s19, 3
      %p270 = pnand %p268, %p269
      %p271 = pneg %p270
      // Predicated region
      $region9: #{tpu_custom_call.1} parent=5 // pred_check
        _
      $region10: #{tpu_custom_call.1} parent=5 // pred_check_branch
        %273 = sbr.rel (%p270) target = $region12
      $region11: #{tpu_custom_call.1} parent=5 // pred_region
        %s274 = ssub.s32 %s19, 1
        // Predicated region
        $region13: #{tpu_custom_call.1} parent=11 // pred_check
          %p275 = pneg %p66
        $region14: #{tpu_custom_call.1} parent=11 // pred_check_branch
          %277 = sbr.rel (%p275) target = $region16
        $region15: #{tpu_custom_call.1} parent=11 // pred_region
          _
        $region16: #{tpu_custom_call.1} parent=11 // pred_fallthru
          _
        // Predicated region
        $region17: #{tpu_custom_call.1} parent=11 // pred_check
          %p278 = pneg %p87
        $region18: #{tpu_custom_call.1} parent=11 // pred_check_branch
          %280 = sbr.rel (%p278) target = $region20
        $region19: #{tpu_custom_call.1} parent=11 // pred_region
          _
        $region20: #{tpu_custom_call.1} parent=11 // pred_fallthru
          _
        // Predicated region
        $region21: #{tpu_custom_call.1} parent=11 // pred_check
          %p281 = pneg %p108
        $region22: #{tpu_custom_call.1} parent=11 // pred_check_branch
          %283 = sbr.rel (%p281) target = $region24
        $region23: #{tpu_custom_call.1} parent=11 // pred_region
          _
        $region24: #{tpu_custom_call.1} parent=11 // pred_fallthru
          _
        // Predicated region
        $region25: #{tpu_custom_call.1} parent=11 // pred_check
          %p284 = pneg %p129
        $region26: #{tpu_custom_call.1} parent=11 // pred_check_branch
          %286 = sbr.rel (%p284) target = $region28
        $region27: #{tpu_custom_call.1} parent=11 // pred_region
          _
        $region28: #{tpu_custom_call.1} parent=11 // pred_fallthru
          _
        // Predicated region
        $region29: #{tpu_custom_call.1} parent=11 // pred_check
          %p287 = pneg %p150
        $region30: #{tpu_custom_call.1} parent=11 // pred_check_branch
          %289 = sbr.rel (%p287) target = $region32
        $region31: #{tpu_custom_call.1} parent=11 // pred_region
          _
        $region32: #{tpu_custom_call.1} parent=11 // pred_fallthru
          _
        // Predicated region
        $region33: #{tpu_custom_call.1} parent=11 // pred_check
          %p290 = pneg %p171
        $region34: #{tpu_custom_call.1} parent=11 // pred_check_branch
          %292 = sbr.rel (%p290) target = $region36
        $region35: #{tpu_custom_call.1} parent=11 // pred_region
          _
        $region36: #{tpu_custom_call.1} parent=11 // pred_fallthru
          _
        // Predicated region
        $region37: #{tpu_custom_call.1} parent=11 // pred_check
          %p293 = pneg %p192
        $region38: #{tpu_custom_call.1} parent=11 // pred_check_branch
          %295 = sbr.rel (%p293) target = $region40
        $region39: #{tpu_custom_call.1} parent=11 // pred_region
          _
        $region40: #{tpu_custom_call.1} parent=11 // pred_fallthru
          _
        // Predicated region
        $region41: #{tpu_custom_call.1} parent=11 // pred_check
          %p296 = pneg %p213
        $region42: #{tpu_custom_call.1} parent=11 // pred_check_branch
          %298 = sbr.rel (%p296) target = $region44
        $region43: #{tpu_custom_call.1} parent=11 // pred_region
          _
        $region44: #{tpu_custom_call.1} parent=11 // pred_fallthru
          _
        // Predicated region
        $region45: #{tpu_custom_call.1} parent=11 // pred_check
          %p299 = pneg %p234
        $region46: #{tpu_custom_call.1} parent=11 // pred_check_branch
          %301 = sbr.rel (%p299) target = $region48
        $region47: #{tpu_custom_call.1} parent=11 // pred_region
          _
        $region48: #{tpu_custom_call.1} parent=11 // pred_fallthru
          _
      $region12: #{tpu_custom_call.1} parent=5 // pred_fallthru
        _
      %p302 = scmp.lt.s32.totalorder %s19, 2
      // Predicated region
      $region49: #{tpu_custom_call.1} parent=5 // pred_check
        %p303 = pneg %p302
      $region50: #{tpu_custom_call.1} parent=5 // pred_check_branch
        %305 = sbr.rel (%p303) target = $region52
      $region51: #{tpu_custom_call.1} parent=5 // pred_region
        // Predicated region
        $region53: #{tpu_custom_call.1} parent=51 // pred_check
          %p306 = pneg %p39
        $region54: #{tpu_custom_call.1} parent=51 // pred_check_branch
          %308 = sbr.rel (%p306) target = $region56
        $region55: #{tpu_custom_call.1} parent=51 // pred_region
          %p309 = scmp.lt.s32.totalorder %s19, 1
          %s310 = scalar_select %p309, %s19, 1
          %s311 = smul.addr %s310, 4
          %s312 = smul.addr %s311, 8
          %s313 = scalar_lea.vmem %s0, %s312
        $region56: #{tpu_custom_call.1} parent=51 // pred_fallthru
          _
      $region52: #{tpu_custom_call.1} parent=5 // pred_fallthru
        _
      %p314 = scmp.le.s32.totalorder 1, %s19
      %p315 = scmp.lt.s32.totalorder %s19, 3
      %p316 = pnand %p314, %p315
      %p317 = pneg %p316
      // Predicated region
      $region57: #{tpu_custom_call.1} parent=5 // pred_check
        _
      $region58: #{tpu_custom_call.1} parent=5 // pred_check_branch
        %319 = sbr.rel (%p316) target = $region60
      $region59: #{tpu_custom_call.1} parent=5 // pred_region
        %s320 = ssub.s32 %s19, 1
        %p321 = scmp.lt.s32.totalorder %s24, 1
        %s322 = scalar_select %p321, %s24, 1
        %s323 = smul.addr %s322, 4
        %s324 = smul.addr %s323, 8
        %s325 = scalar_lea.vmem %s0, %s324
        %p326 = pneg %p45
        %p327 = pneg %p42
        %p328 = pneg %p66
        %p329 = pneg %p63
        %p330 = pneg %p87
        %p331 = pneg %p84
        %p332 = pneg %p108
        %p333 = pneg %p105
        %p334 = pneg %p129
        %p335 = pneg %p126
        %p336 = pneg %p150
        %p337 = pneg %p147
        %p338 = pneg %p171
        %p339 = pneg %p168
        %p340 = pneg %p192
        %p341 = pneg %p189
        %p342 = pneg %p213
        %p343 = pneg %p210
        %p344 = pneg %p234
        %p345 = pneg %p231
        %p346 = pneg %p260
        %p347 = pneg %p257
        %s348 = sand.u32 %s247, 1
        %s349 = scalar_lea.sflag [#allocation3], %s348
        %s350 = sand.u32 %s247, 1
        %s351 = smul.addr %s350, 32
        %s352 = scalar_lea.vmem [#allocation2], %s351
        %p353 = scmp.lt.s32.totalorder %s24, 1
        %s354 = scalar_select %p353, %s24, 1
        %s355 = smul.addr %s354, 4
        %s356 = smul.addr %s355, 8
        %s357 = scalar_lea.vmem %s0, %s356
        %v359 = vld [vmem:[%s357] sm:$0xff]
        %v360 = vld [vmem:[%s357 + $0x8] sm:$0xff]
        %v361 = vld [vmem:[%s357 + $0x10] sm:$0xff]
        %v362 = vld [vmem:[%s357 + $0x18] sm:$0xff]
        %v363 = vld [vmem:[%s1] sm:$0xf]
        %v364 = vpack.c.bf16 %v361, %v359
        %v365 = vpack.c.bf16 %v362, %v360
        %vm366 = vcmask 130048
        %v368 = vsel %vm366, %v363, 0
        %370 = vmatprep.subr.bf16.mxu0 0
        %371 = vmatpush1.bf16.msra.mxu0 0
        %372 = vmatprep.subr.bf16.mxu0 0
        %373 = vmatpush1.bf16.msra.mxu0 0
        %374 = vmatprep.subr.bf16.mxu0 0
        %375 = vmatpush1.bf16.msra.mxu0 0
        %376 = vmatprep.subr.bf16.mxu0 0
        %377 = vmatpush1.bf16.msra.mxu0 0
        %378 = vmatprep.subr.bf16.mxu0 0
        %379 = vmatpush1.bf16.msra.mxu0 0
        %380 = vmatprep.subr.bf16.mxu0 0
        %381 = vmatpush1.bf16.msra.mxu0 0
        %382 = vmatprep.subr.bf16.mxu0 0
        %383 = vmatpush1.bf16.msra.mxu0 0
        %384 = vmatprep.subr.bf16.mxu0 %v365
        %385 = vmatpush1.bf16.msra.mxu0 %v364
        %386 = vmatprep.subr.bf16.mxu0 0
        %387 = vmatpush2.bf16.msra.mxu0 0
        %388 = vmatprep.subr.bf16.mxu0 0
        %389 = vmatpush2.bf16.msra.mxu0 0
        %390 = vmatprep.subr.bf16.mxu0 0
        %391 = vmatpush2.bf16.msra.mxu0 0
        %392 = vmatprep.subr.bf16.mxu0 0
        %393 = vmatpush2.bf16.msra.mxu0 0
        %394 = vmatprep.subr.bf16.mxu0 0
        %395 = vmatpush2.bf16.msra.mxu0 0
        %396 = vmatprep.subr.bf16.mxu0 0
        %397 = vmatpush2.bf16.msra.mxu0 0
        %398 = vmatprep.subr.bf16.mxu0 0
        %399 = vmatpush2.bf16.msra.mxu0 0
        %400 = vmatprep.subr.bf16.mxu0 0
        %401 = vmatpush2.bf16.msra.mxu0 0
        %402 = vmatprep.mubr.bf16.mxu0 0
        %403 = vmatmul.mubr.bf16.gmra.mxu0 %v368
        %v404 = vpop.f32.mrf.mxu0
        %v405 = vadd.f32 0.0, %v404
        %v406 = vpop.f32.mrf.mxu0
        %v407 = vadd.f32 0.0, %v406
        %v408 = vpop.f32.mrf.mxu0
        %v409 = vpop.f32.mrf.mxu0
        %410 = vdwg.mxu0
        %v411 = vld [vmem:[%s2] sm:$0xff]
        %413 = vset.pattern.permute.xlu0 0
        %414 = vperm.xlu0 %413, %v411
        %v415 = vpop.permute.xlu0 %414
        %v417 = vmul.f32 %v405, %v415
        %v418 = vmul.f32 %v407, %v415
        %v419 = vld [vmem:[%s3] sm:$0xff]
        %421 = vset.pattern.permute.xlu0 0
        %422 = vperm.xlu0 %421, %v419
        %v423 = vpop.permute.xlu0 %422
        %v425 = vadd.f32 %v417, %v423
        %v426 = vadd.f32 %v418, %v423
        %v427 = vmax.f32 %v425, 0.0
        %v428 = vmax.f32 %v426, 0.0
        %v429 = vlaneseq
        %v430 = vand.u32 %v429, 127
        %v431 = vadd.s32 %v430, 128
        %vm432 = vcmp.lt.s32.totalorder %v430, 0
        %v433 = vsub.s32 0, %v430
        %v434 = vsel %vm432, %v433, %v430
        %v435 = vshrl.u32 %v434, 4
        %v436 = vand.u32 %v434, 15
        %v437 = vsub.s32 0, %v436
        %v438 = vsel %vm432, %v437, %v436
        %vm439 = vcmp.lt.s32.totalorder %v431, 0
        %v440 = vsub.s32 0, %v431
        %v441 = vsel %vm439, %v440, %v431
        %v442 = vshrl.u32 %v441, 4
        %v443 = vand.u32 %v441, 15
        %v444 = vsub.s32 0, %v443
        %v445 = vsel %vm439, %v444, %v443
        %vm446 = vcmp.ne.s32.totalorder %v438, 0
        %vm447 = vcmp.ne.s32.totalorder %v445, 0
        %vm448 = vcmp.lt.s32.totalorder %v438, 0
        %vm449 = vcmp.lt.s32.totalorder %v445, 0
        %vm450 = vmand %vm448, %vm446
        %vm451 = vmand %vm449, %vm447
        %v452 = vadd.s32 %v438, 16
        %v453 = vadd.s32 %v445, 16
        %v454 = vsel %vm450, %v452, %v438
        %v455 = vsel %vm451, %v453, %v445
        %vm456 = vcmp.ge.s32.totalorder %v454, 1
        %vm457 = vcmp.ge.s32.totalorder %v455, 1
        %vm458 = vcmp.le.s32.totalorder %v454, 14
        %vm459 = vcmp.le.s32.totalorder %v455, 14
        %v460 = vsel %vm456, 1, 0
        %v461 = vsel %vm457, 1, 0
        %vm462 = vcmp.eq.s32.totalorder %v460, 1
        %vm463 = vcmp.eq.s32.totalorder %v461, 1
        %467 = vrot.lane.b32.xlu0 0.0, 17
        %v468 = vpop.permute.xlu0 %467
        %469 = vrot.lane.b32.xlu0 %v427, 17
        %v470 = vpop.permute.xlu0 %469
        %471 = vrot.lane.b32.xlu0 %v428, 17
        %v472 = vpop.permute.xlu0 %471
        %vm473 = vcmask 138240
        %v474 = vsel %vm473, %v468, %v470
        %v475 = vsel %vm473, %v470, %v472
        %v478 = vsel %vm462, %v474, 0.0
        %v479 = vsel %vm463, %v475, 0.0
        %v480 = vsel %vm458, 1, 0
        %v481 = vsel %vm459, 1, 0
        %vm482 = vcmp.eq.s32.totalorder %v480, 1
        %vm483 = vcmp.eq.s32.totalorder %v481, 1
        %484 = vrot.lane.b32.xlu0 0.0, 15
        %v485 = vpop.permute.xlu0 %484
        %486 = vrot.lane.b32.xlu0 %v427, 15
        %v487 = vpop.permute.xlu0 %486
        %488 = vrot.lane.b32.xlu0 %v428, 15
        %v489 = vpop.permute.xlu0 %488
        %vm490 = vcmask 121856
        %v491 = vsel %vm490, %v485, %v487
        %v492 = vsel %vm490, %v487, %v489
        %v495 = vsel %vm482, %v491, 0.0
        %v496 = vsel %vm483, %v492, 0.0
        %497 = vrot.lane.b32.xlu0 0.0, 1
        %v498 = vpop.permute.xlu0 %497
        %499 = vrot.lane.b32.xlu0 %v427, 1
        %v500 = vpop.permute.xlu0 %499
        %501 = vrot.lane.b32.xlu0 %v428, 1
        %v502 = vpop.permute.xlu0 %501
        %vm503 = vcmask 7168
        %v504 = vsel %vm503, %v498, %v500
        %v505 = vsel %vm503, %v500, %v502
        %v508 = vsel %vm462, %v504, 0.0
        %v509 = vsel %vm463, %v505, 0.0
        %510 = vrot.lane.b32.xlu0 %v427, 127
        %v511 = vpop.permute.xlu0 %510
        %512 = vrot.lane.b32.xlu0 %v428, 127
        %v513 = vpop.permute.xlu0 %512
        %514 = vrot.lane.b32.xlu0 0.0, 127
        %v515 = vpop.permute.xlu0 %514
        %vm516 = vcmask 1039360
        %v517 = vsel %vm516, %v511, %v513
        %v518 = vsel %vm516, %v513, %v515
        %v521 = vsel %vm482, %v517, 0.0
        %v522 = vsel %vm483, %v518, 0.0
        %523 = vrot.lane.b32.xlu0 %v427, 113
        %v524 = vpop.permute.xlu0 %523
        %525 = vrot.lane.b32.xlu0 %v428, 113
        %v526 = vpop.permute.xlu0 %525
        %527 = vrot.lane.b32.xlu0 0.0, 113
        %v528 = vpop.permute.xlu0 %527
        %vm529 = vcmask 924672
        %v530 = vsel %vm529, %v524, %v526
        %v531 = vsel %vm529, %v526, %v528
        %v534 = vsel %vm462, %v530, 0.0
        %v535 = vsel %vm463, %v531, 0.0
        %536 = vrot.lane.b32.xlu0 %v427, 111
        %v537 = vpop.permute.xlu0 %536
        %538 = vrot.lane.b32.xlu0 %v428, 111
        %v539 = vpop.permute.xlu0 %538
        %540 = vrot.lane.b32.xlu0 0.0, 111
        %v541 = vpop.permute.xlu0 %540
        %vm542 = vcmask 908288
        %v543 = vsel %vm542, %v537, %v539
        %v544 = vsel %vm542, %v539, %v541
        %v547 = vsel %vm482, %v543, 0.0
        %v548 = vsel %vm483, %v544, 0.0
        %549 = vrot.lane.b32.xlu0 0.0, 16
        %v550 = vpop.permute.xlu0 %549
        %551 = vrot.lane.b32.xlu0 %v427, 16
        %v552 = vpop.permute.xlu0 %551
        %553 = vrot.lane.b32.xlu0 %v428, 16
        %v554 = vpop.permute.xlu0 %553
        %v555 = vsel %vm366, %v550, %v552
        %v556 = vsel %vm366, %v552, %v554
        %559 = vrot.lane.b32.xlu0 %v427, 112
        %v560 = vpop.permute.xlu0 %559
        %561 = vrot.lane.b32.xlu0 %v428, 112
        %v562 = vpop.permute.xlu0 %561
        %563 = vrot.lane.b32.xlu0 0.0, 112
        %v564 = vpop.permute.xlu0 %563
        %vm565 = vcmask 916480
        %v566 = vsel %vm565, %v560, %v562
        %v567 = vsel %vm565, %v562, %v564
        %v570 = vld [vmem:[%s4] sm:$0xf]
        %v571 = vpack.c.bf16 %v555, %v478
        %v572 = vpack.c.bf16 %v556, %v479
        %v573 = vpack.c.bf16 %v508, %v495
        %v574 = vpack.c.bf16 %v509, %v496
        %v575 = vpack.c.bf16 %v521, %v427
        %v576 = vpack.c.bf16 %v522, %v428
        %v577 = vpack.c.bf16 %v566, %v534
        %v578 = vpack.c.bf16 %v567, %v535
        %v579 = vpack.c.bf16 %v547, %v547
        %v580 = vpack.c.bf16 %v548, %v548
        %vm581 = vcmask 588800
        %v583 = vsel %vm581, %v570, 0
        %vm585 = vcmask 1043456
        %v587 = vsel %vm585, %v579, 0
        %v590 = vsel %vm585, %v580, 0
        %592 = vmatprep.subr.bf16.mxu0 0
        %593 = vmatpush1.bf16.msra.mxu0 0
        %594 = vmatprep.subr.bf16.mxu0 0
        %595 = vmatpush1.bf16.msra.mxu0 0
        %596 = vmatprep.subr.bf16.mxu0 0
        %597 = vmatpush1.bf16.msra.mxu0 0
        %598 = vmatprep.subr.bf16.mxu0 %v590
        %599 = vmatpush1.bf16.msra.mxu0 %v587
        %600 = vmatprep.subr.bf16.mxu0 %v578
        %601 = vmatpush1.bf16.msra.mxu0 %v577
        %602 = vmatprep.subr.bf16.mxu0 %v576
        %603 = vmatpush1.bf16.msra.mxu0 %v575
        %604 = vmatprep.subr.bf16.mxu0 %v574
        %605 = vmatpush1.bf16.msra.mxu0 %v573
        %606 = vmatprep.subr.bf16.mxu0 %v572
        %607 = vmatpush1.bf16.msra.mxu0 %v571
        %608 = vmatprep.subr.bf16.mxu0 0
        %609 = vmatpush2.bf16.msra.mxu0 0
        %610 = vmatprep.subr.bf16.mxu0 0
        %611 = vmatpush2.bf16.msra.mxu0 0
        %612 = vmatprep.subr.bf16.mxu0 0
        %613 = vmatpush2.bf16.msra.mxu0 0
        %614 = vmatprep.subr.bf16.mxu0 0
        %615 = vmatpush2.bf16.msra.mxu0 0
        %616 = vmatprep.subr.bf16.mxu0 0
        %617 = vmatpush2.bf16.msra.mxu0 0
        %618 = vmatprep.subr.bf16.mxu0 0
        %619 = vmatpush2.bf16.msra.mxu0 0
        %620 = vmatprep.subr.bf16.mxu0 0
        %621 = vmatpush2.bf16.msra.mxu0 0
        %622 = vmatprep.subr.bf16.mxu0 0
        %623 = vmatpush2.bf16.msra.mxu0 0
        %624 = vmatprep.mubr.bf16.mxu0 0
        %625 = vmatmul.mubr.bf16.gmra.mxu0 %v583
        %v626 = vpop.f32.mrf.mxu0
        %v627 = vadd.f32 0.0, %v626
        %v628 = vpop.f32.mrf.mxu0
        %v629 = vadd.f32 0.0, %v628
        %v630 = vpop.f32.mrf.mxu0
        %v631 = vpop.f32.mrf.mxu0
        %632 = vdwg.mxu0
        %v633 = vld [vmem:[%s5] sm:$0xff]
        %635 = vset.pattern.permute.xlu0 0
        %636 = vperm.xlu0 %635, %v633
        %v637 = vpop.permute.xlu0 %636
        %v639 = vmul.f32 %v627, %v637
        %v640 = vmul.f32 %v629, %v637
        %v641 = vld [vmem:[%s6] sm:$0xff]
        %643 = vset.pattern.permute.xlu0 0
        %644 = vperm.xlu0 %643, %v641
        %v645 = vpop.permute.xlu0 %644
        %v647 = vadd.f32 %v639, %v645
        %v648 = vadd.f32 %v640, %v645
        %v649 = vmax.f32 %v647, 0.0
        %v650 = vmax.f32 %v648, 0.0
        %v651 = vld [vmem:[%s7] sm:$0xf]
        %v652 = vld [vmem:[%s7 + $0x4] sm:$0xf]
        %v653 = vpack.c.bf16 %v649, %v649
        %v654 = vpack.c.bf16 %v650, %v650
        %v657 = vunpack.c.l.b16 %v651
        %v658 = vunpack.c.l.b16 %v652
        %v659 = vpack.c.b16 %v658, %v657
        %vm660 = vcmask 64512
        %v662 = vsel %vm660, %v659, 0
        %v665 = vsel %vm585, %v653, 0
        %v668 = vsel %vm585, %v654, 0
        %670 = vmatprep.subr.bf16.mxu0 0
        %671 = vmatpush1.bf16.msra.mxu0 0
        %672 = vmatprep.subr.bf16.mxu0 0
        %673 = vmatpush1.bf16.msra.mxu0 0
        %674 = vmatprep.subr.bf16.mxu0 0
        %675 = vmatpush1.bf16.msra.mxu0 0
        %676 = vmatprep.subr.bf16.mxu0 0
        %677 = vmatpush1.bf16.msra.mxu0 0
        %678 = vmatprep.subr.bf16.mxu0 0
        %679 = vmatpush1.bf16.msra.mxu0 0
        %680 = vmatprep.subr.bf16.mxu0 0
        %681 = vmatpush1.bf16.msra.mxu0 0
        %682 = vmatprep.subr.bf16.mxu0 0
        %683 = vmatpush1.bf16.msra.mxu0 0
        %684 = vmatprep.subr.bf16.mxu0 %v668
        %685 = vmatpush1.bf16.msra.mxu0 %v665
        %686 = vmatprep.subr.bf16.mxu0 0
        %687 = vmatpush2.bf16.msra.mxu0 0
        %688 = vmatprep.subr.bf16.mxu0 0
        %689 = vmatpush2.bf16.msra.mxu0 0
        %690 = vmatprep.subr.bf16.mxu0 0
        %691 = vmatpush2.bf16.msra.mxu0 0
        %692 = vmatprep.subr.bf16.mxu0 0
        %693 = vmatpush2.bf16.msra.mxu0 0
        %694 = vmatprep.subr.bf16.mxu0 0
        %695 = vmatpush2.bf16.msra.mxu0 0
        %696 = vmatprep.subr.bf16.mxu0 0
        %697 = vmatpush2.bf16.msra.mxu0 0
        %698 = vmatprep.subr.bf16.mxu0 0
        %699 = vmatpush2.bf16.msra.mxu0 0
        %700 = vmatprep.subr.bf16.mxu0 0
        %701 = vmatpush2.bf16.msra.mxu0 0
        %702 = vmatprep.mubr.bf16.mxu0 0
        %703 = vmatmul.mubr.bf16.gmra.mxu0 %v662
        %v704 = vpop.f32.mrf.mxu0
        %v705 = vadd.f32 0.0, %v704
        %v706 = vpop.f32.mrf.mxu0
        %v707 = vadd.f32 0.0, %v706
        %v708 = vpop.f32.mrf.mxu0
        %v709 = vadd.f32 0.0, %v708
        %v710 = vpop.f32.mrf.mxu0
        %v711 = vadd.f32 0.0, %v710
        %712 = vdwg.mxu0
        %v713 = vld [vmem:[%s8] sm:$0xff]
        %v714 = vld [vmem:[%s8 + $0x8] sm:$0xff]
        %716 = vset.pattern.permute.xlu0 0
        %717 = vperm.xlu0 %716, %v713
        %v718 = vpop.permute.xlu0 %717
        %721 = vset.pattern.permute.xlu0 0
        %722 = vperm.xlu0 %721, %v714
        %v723 = vpop.permute.xlu0 %722
        %v725 = vmul.f32 %v705, %v718
        %v726 = vmul.f32 %v707, %v718
        %v727 = vmul.f32 %v709, %v723
        %v728 = vmul.f32 %v711, %v723
        %v729 = vld [vmem:[%s9] sm:$0xff]
        %v730 = vld [vmem:[%s9 + $0x8] sm:$0xff]
        %732 = vset.pattern.permute.xlu0 0
        %733 = vperm.xlu0 %732, %v729
        %v734 = vpop.permute.xlu0 %733
        %737 = vset.pattern.permute.xlu0 0
        %738 = vperm.xlu0 %737, %v730
        %v739 = vpop.permute.xlu0 %738
        %v741 = vadd.f32 %v725, %v734
        %v742 = vadd.f32 %v726, %v734
        %v743 = vadd.f32 %v727, %v739
        %v744 = vadd.f32 %v728, %v739
        %v745 = vadd.f32 %v741, %v359
        %v746 = vadd.f32 %v742, %v360
        %v747 = vadd.f32 %v743, %v361
        %v748 = vadd.f32 %v744, %v362
        %v749 = vmax.f32 %v745, 0.0
        %v750 = vmax.f32 %v746, 0.0
        %v751 = vmax.f32 %v747, 0.0
        %v752 = vmax.f32 %v748, 0.0
        %753 = vst [vmem:[%s352] sm:$0xff] %v749
        %754 = vst [vmem:[%s352 + $0x8] sm:$0xff] %v750
        %755 = vst [vmem:[%s352 + $0x10] sm:$0xff] %v751
        %756 = vst [vmem:[%s352 + $0x18] sm:$0xff] %v752
        %s757 = sand.u32 %s247, 1
        %s758 = scalar_lea.sflag [#allocation3], %s757
        %s759 = sand.u32 %s247, 1
        %s760 = smul.addr %s759, 32
        %s761 = scalar_lea.vmem [#allocation2], %s760
        // Predicated region
        $region61: #{tpu_custom_call.1} parent=59 // pred_check
          %p762 = pneg %p257
        $region62: #{tpu_custom_call.1} parent=59 // pred_check_branch
          %764 = sbr.rel (%p762) target = $region64
        $region63: #{tpu_custom_call.1} parent=59 // pred_region
          %s766 = ssub.s32 512, 512
          %767 = vsyncadd %s758, %s766
          %s768 = smul.addr %s24, 4
          %s769 = smul.addr %s768, 128
          %s770 = scalar_lea.hbm %s10, %s769
          %s771 = sshll.u32 %s761, 4
          %s772 = int_to_ptr.vmem [resolvable:$true] %s771
          %777 = dma.vmem_to_hbm [thread:$0]  %s772, 512, %s770, %s758, 256, 256, 16
        $region64: #{tpu_custom_call.1} parent=59 // pred_fallthru
          _
      $region60: #{tpu_custom_call.1} parent=5 // pred_fallthru
        _
      %p778 = scmp.le.s32.totalorder 2, %s19
      // Predicated region
      $region65: #{tpu_custom_call.1} parent=5 // pred_check
        %p779 = pneg %p778
      $region66: #{tpu_custom_call.1} parent=5 // pred_check_branch
        %781 = sbr.rel (%p779) target = $region68
      $region67: #{tpu_custom_call.1} parent=5 // pred_region
        %s782 = ssub.s32 %s19, 2
        // Predicated region
        $region69: #{tpu_custom_call.1} parent=67 // pred_check
          %p783 = pneg %p263
        $region70: #{tpu_custom_call.1} parent=67 // pred_check_branch
          %785 = sbr.rel (%p783) target = $region72
        $region71: #{tpu_custom_call.1} parent=67 // pred_region
          %s786 = sand.u32 %s248, 1
          %s787 = scalar_lea.sflag [#allocation3], %s786
          %s788 = sand.u32 %s248, 1
          %s789 = smul.addr %s788, 32
          %s790 = scalar_lea.vmem [#allocation2], %s789
          %791 = dma.done %s787, 512
        $region72: #{tpu_custom_call.1} parent=67 // pred_fallthru
          _
      $region68: #{tpu_custom_call.1} parent=5 // pred_fallthru
        _
    $region6: #{tpu_custom_call.1} parent=1 // loop_footer
      %s23 = sadd.s32 1, %s19
    $region7: #{tpu_custom_call.1} parent=1 // loop_footer_branch
      %18 = sbr.rel target = $region3
    $region8: #{tpu_custom_call.1} parent=1 // loop_exit
      _
    %792 = vsyncpa [#allocation3], 1
    %s793 = scalar_lea.sflag [#allocation3], 1
    %794 = vsyncpa %s793, 1

</llo_original>
